<compile_context>
chip_gen: v5e
topology: v5e:2x2
jax: 0.10.0
libtpu: 0.0.40
codegen_flags: <defaults>
</compile_context>

<pallas_src>
import functools

import jax
import jax.numpy as jnp
from jax.experimental import pallas as pl
from jax.experimental.pallas import tpu as pltpu

_LANE = 128      # vreg lane width (last dim)
_SUBLANE = 8     # vreg sublane width (second-to-last dim)
_MAX_BATCH_TILE = 256


def _round_up(n, m):
    return ((n + m - 1) // m) * m


def _pad_axis(a, axis, target):
    pad = target - a.shape[axis]
    if pad <= 0:
        return a
    widths = [(0, 0)] * a.ndim
    widths[axis] = (0, pad)
    return jnp.pad(a, widths)


def _mlp_hidden_kernel(n_hidden,
                       x_ref, w0_ref, b0_ref, wh_ref, bh_ref, wf_ref, bf_ref,
                       o_ref):
    """MLP forward for one batch tile (with n_hidden >= 1 hidden layers).

    x_ref : (TB, in_pad)               bf16
    w0_ref: (in_pad, nn_pad)           bf16   b0_ref: (1, nn_pad)          f32
    wh_ref: (n_hidden, nn_pad, nn_pad) bf16   bh_ref: (n_hidden, 1, nn_pad) f32
    wf_ref: (nn_pad, out_pad)          bf16   bf_ref: (1, out_pad)         f32
    o_ref : (TB, out_pad)              f32
    """
    cdt = w0_ref.dtype
    # First layer + ReLU (accumulate in f32, activations in f32).
    h = jnp.dot(x_ref[...], w0_ref[...], preferred_element_type=jnp.float32)
    h = jnp.maximum(h + b0_ref[...], 0.0)

    # Hidden layers + ReLU (small static trip count -> unrolled at trace time).
    # TODO(synk): switch to lax.fori_loop for very deep nets (vreg live ranges).
    for i in range(n_hidden):
        h = jnp.dot(h.astype(cdt), wh_ref[i],
                    preferred_element_type=jnp.float32)
        h = jnp.maximum(h + bh_ref[i], 0.0)

    # Final layer + Sigmoid (f32), store full-lane.
    y = jnp.dot(h.astype(cdt), wf_ref[...],
                preferred_element_type=jnp.float32)
    o_ref[...] = jax.nn.sigmoid(y + bf_ref[...]).astype(o_ref.dtype)


def _mlp_no_hidden_kernel(x_ref, w0_ref, b0_ref, wf_ref, bf_ref, o_ref):
    """MLP forward with no hidden (n_nodes x n_nodes) layers."""
    cdt = w0_ref.dtype
    h = jnp.dot(x_ref[...], w0_ref[...], preferred_element_type=jnp.float32)
    h = jnp.maximum(h + b0_ref[...], 0.0)
    y = jnp.dot(h.astype(cdt), wf_ref[...],
                preferred_element_type=jnp.float32)
    o_ref[...] = jax.nn.sigmoid(y + bf_ref[...]).astype(o_ref.dtype)


def _resident_spec(a):
    """Weight/bias stays in VMEM across all grid steps (constant block index)."""
    ndim = a.ndim
    return pl.BlockSpec(a.shape, lambda i: (0,) * ndim)


def surrogate_fnn_forward(x, params, *, n_layers,
                          batch_tile=_MAX_BATCH_TILE,
                          compute_dtype=jnp.bfloat16):
    """SurrogateFNN forward with a single batch-tiled pallas_call.

    params: dict with
      'w0' (input_size, n_nodes), 'b0' (n_nodes,),
      'wh' (n_layers-1, n_nodes, n_nodes), 'bh' (n_layers-1, n_nodes),
      'wf' (n_nodes, output_size), 'bf' (output_size,)
    """
    n_hidden = n_layers - 1
    batch, input_size = x.shape
    n_nodes = params["w0"].shape[1]
    output_size = params["wf"].shape[1]

    # Lane-dense padded feature dims (zero padding is inert through the net).
    in_pad = _round_up(input_size, _LANE)
    nn_pad = _round_up(n_nodes, _LANE)
    out_pad = _round_up(output_size, _LANE)

    # Batch tile: multiple of 8 sublanes, capped so x/out double-buffers plus
    # resident weights stay far below the v7x/v5e scoped-VMEM budgets.
    tb = min(batch_tile, _round_up(batch, _SUBLANE))
    tb = _round_up(tb, _SUBLANE)
    batch_pad = _round_up(batch, tb)
    grid = (batch_pad // tb,)

    # Host-side padding / casts. Matmul operands in bf16 (halves HBM traffic),
    # biases kept in f32 for the f32 bias-add/ReLU/sigmoid path.
    xp = _pad_axis(_pad_axis(x, 1, in_pad), 0, batch_pad).astype(compute_dtype)
    w0 = _pad_axis(_pad_axis(params["w0"], 0, in_pad), 1, nn_pad).astype(compute_dtype)
    b0 = _pad_axis(params["b0"].reshape(1, -1), 1, nn_pad).astype(jnp.float32)
    wf = _pad_axis(_pad_axis(params["wf"], 0, nn_pad), 1, out_pad).astype(compute_dtype)
    bf = _pad_axis(params["bf"].reshape(1, -1), 1, out_pad).astype(jnp.float32)

    x_spec = pl.BlockSpec((tb, in_pad), lambda i: (i, 0))
    out_spec = pl.BlockSpec((tb, out_pad), lambda i: (i, 0))

    if n_hidden > 0:
        wh = _pad_axis(_pad_axis(params["wh"], 1, nn_pad), 2, nn_pad)
        wh = wh.astype(compute_dtype)
        bh = _pad_axis(params["bh"], 1, nn_pad).astype(jnp.float32)
        bh = bh.reshape(n_hidden, 1, nn_pad)   # pre-shaped: no in-kernel reshape
        kernel = functools.partial(_mlp_hidden_kernel, n_hidden)
        operands = (xp, w0, b0, wh, bh, wf, bf)
        in_specs = [x_spec, _resident_spec(w0), _resident_spec(b0),
                    _resident_spec(wh), _resident_spec(bh),
                    _resident_spec(wf), _resident_spec(bf)]
    else:
        # No dummy wh/bh DMA when there are no hidden layers.
        kernel = _mlp_no_hidden_kernel
        operands = (xp, w0, b0, wf, bf)
        in_specs = [x_spec, _resident_spec(w0), _resident_spec(b0),
                    _resident_spec(wf), _resident_spec(bf)]

    out_padded = pl.pallas_call(
        kernel,
        out_shape=jax.ShapeDtypeStruct((batch_pad, out_pad), x.dtype),
        grid=grid,
        in_specs=in_specs,
        out_specs=out_spec,
        compiler_params=pltpu.CompilerParams(
            dimension_semantics=("parallel",)),
    )(*operands)

    return out_padded[:batch, :output_size]


def init_params(key, input_size, output_size, n_layers, n_nodes,
                dtype=jnp.float32):
    """Deterministic init mimicking PyTorch Linear's U(-1/sqrt(fan_in), ...)."""
    def linear(k, fan_in, fan_out):
        kw, kb = jax.random.split(k)
        bound = 1.0 / jnp.sqrt(jnp.asarray(fan_in, jnp.float32))
        # stored as (in, out) == PyTorch weight.T
        w = jax.random.uniform(kw, (fan_in, fan_out), dtype, -bound, bound)
        b = jax.random.uniform(kb, (fan_out,), dtype, -bound, bound)
        return w, b

    keys = jax.random.split(key, n_layers + 1)
    w0, b0 = linear(keys[0], input_size, n_nodes)
    n_hidden = n_layers - 1
    if n_hidden > 0:
        whs, bhs = zip(*(linear(keys[1 + i], n_nodes, n_nodes)
                         for i in range(n_hidden)))
        wh = jnp.stack(whs)
        bh = jnp.stack(bhs)
    else:
        wh = jnp.zeros((0, n_nodes, n_nodes), dtype)
        bh = jnp.zeros((0, n_nodes), dtype)
    wf, bf = linear(keys[-1], n_nodes, output_size)
    return {"w0": w0, "b0": b0, "wh": wh, "bh": bh, "wf": wf, "bf": bf}


def reference_forward(x, params, *, n_layers):
    """Pure-JAX f32 reference of the PyTorch forward (for correctness check)."""
    h = jnp.maximum(x @ params["w0"] + params["b0"], 0.0)
    for i in range(n_layers - 1):
        h = jnp.maximum(h @ params["wh"][i] + params["bh"][i], 0.0)
    return jax.nn.sigmoid(h @ params["wf"] + params["bf"])


if __name__ == "__main__":
    # Small shapes consistent with the module: MLP on flat feature vectors.
    batch, input_size, n_nodes, output_size, n_layers = 8, 16, 32, 8, 3

    key = jax.random.PRNGKey(0)
    kx, kp = jax.random.split(key)
    x = jax.random.normal(kx, (batch, input_size), jnp.float32)
    params = init_params(kp, input_size, output_size, n_layers, n_nodes)

    out = surrogate_fnn_forward(x, params, n_layers=n_layers)
    out = jax.block_until_ready(out)

    ref = reference_forward(x, params, n_layers=n_layers)
    assert out.shape == (batch, output_size)
    # bf16 matmul inputs -> looser tolerance than pure-f32 (sigmoid outputs in [0,1]).
    assert jnp.allclose(out, ref, atol=3e-2, rtol=3e-2), "mismatch vs reference"

    print("KERNEL_OK")
</pallas_src>

<mosaic_0001>
module attributes {stable_mosaic.version = 11 : i64} {
  func.func @_mlp_hidden_kernel(%arg0: i32, %arg1: memref<8x128xbf16, #tpu.memory_space<vmem>>, %arg2: memref<128x128xbf16, #tpu.memory_space<vmem>>, %arg3: memref<1x128xf32, #tpu.memory_space<vmem>>, %arg4: memref<2x128x128xbf16, #tpu.memory_space<vmem>>, %arg5: memref<2x1x128xf32, #tpu.memory_space<vmem>>, %arg6: memref<128x128xbf16, #tpu.memory_space<vmem>>, %arg7: memref<1x128xf32, #tpu.memory_space<vmem>>, %arg8: memref<8x128xf32, #tpu.memory_space<vmem>>) attributes {dimension_semantics = [#tpu.dimension_semantics<parallel>], iteration_bounds = array<i64: 1>, scalar_prefetch = 0 : i64, scratch_operands = 0 : i64, tpu.core_type = #tpu.core_type<tc>, window_params = [{transform_indices = @transform_0, window_bounds = array<i64: 8, 128>}, {pipeline_mode = #tpu.pipeline_mode<synchronous>, transform_indices = @transform_1, window_bounds = array<i64: 128, 128>}, {pipeline_mode = #tpu.pipeline_mode<synchronous>, transform_indices = @transform_2, window_bounds = array<i64: 1, 128>}, {pipeline_mode = #tpu.pipeline_mode<synchronous>, transform_indices = @transform_3, window_bounds = array<i64: 2, 128, 128>}, {pipeline_mode = #tpu.pipeline_mode<synchronous>, transform_indices = @transform_4, window_bounds = array<i64: 2, 1, 128>}, {pipeline_mode = #tpu.pipeline_mode<synchronous>, transform_indices = @transform_5, window_bounds = array<i64: 128, 128>}, {pipeline_mode = #tpu.pipeline_mode<synchronous>, transform_indices = @transform_6, window_bounds = array<i64: 1, 128>}, {transform_indices = @transform_7, window_bounds = array<i64: 8, 128>}]} {
    %c0 = arith.constant 0 : index
    %c0_0 = arith.constant 0 : index
    %0 = vector.load %arg1[%c0, %c0_0] : memref<8x128xbf16, #tpu.memory_space<vmem>>, vector<8x128xbf16>
    %c0_1 = arith.constant 0 : index
    %c0_2 = arith.constant 0 : index
    %1 = vector.load %arg2[%c0_1, %c0_2] : memref<128x128xbf16, #tpu.memory_space<vmem>>, vector<128x128xbf16>
    %cst = arith.constant dense<0.000000e+00> : vector<8x128xf32>
    %2 = tpu.matmul %0, %1, %cst {dimension_numbers = #tpu.dot_dimension_numbers<[1], [0], [0], [1], [0, 0, 1, 1], [], []>} : vector<8x128xbf16>, vector<128x128xbf16>, vector<8x128xf32> -> vector<8x128xf32>
    %c0_3 = arith.constant 0 : index
    %c0_4 = arith.constant 0 : index
    %3 = vector.load %arg3[%c0_3, %c0_4] : memref<1x128xf32, #tpu.memory_space<vmem>>, vector<1x128xf32>
    %4 = vector.broadcast %3 : vector<1x128xf32> to vector<8x128xf32>
    %5 = arith.addf %2, %4 : vector<8x128xf32>
    %cst_5 = arith.constant 0.000000e+00 : f32
    %6 = vector.broadcast %cst_5 : f32 to vector<8x128xf32>
    %7 = arith.maximumf %5, %6 : vector<8x128xf32>
    %8 = arith.truncf %7 : vector<8x128xf32> to vector<8x128xbf16>
    %c0_6 = arith.constant 0 : index
    %c0_7 = arith.constant 0 : index
    %c0_8 = arith.constant 0 : index
    %9 = vector.load %arg4[%c0_6, %c0_7, %c0_8] : memref<2x128x128xbf16, #tpu.memory_space<vmem>>, vector<1x128x128xbf16>
    %10 = vector.shape_cast %9 : vector<1x128x128xbf16> to vector<128x128xbf16>
    %cst_9 = arith.constant dense<0.000000e+00> : vector<8x128xf32>
    %11 = tpu.matmul %8, %10, %cst_9 {dimension_numbers = #tpu.dot_dimension_numbers<[1], [0], [0], [1], [0, 0, 1, 1], [], []>} : vector<8x128xbf16>, vector<128x128xbf16>, vector<8x128xf32> -> vector<8x128xf32>
    %c0_10 = arith.constant 0 : index
    %c0_11 = arith.constant 0 : index
    %c0_12 = arith.constant 0 : index
    %12 = vector.load %arg5[%c0_10, %c0_11, %c0_12] : memref<2x1x128xf32, #tpu.memory_space<vmem>>, vector<1x1x128xf32>
    %13 = vector.shape_cast %12 : vector<1x1x128xf32> to vector<1x128xf32>
    %14 = vector.broadcast %13 : vector<1x128xf32> to vector<8x128xf32>
    %15 = arith.addf %11, %14 : vector<8x128xf32>
    %cst_13 = arith.constant 0.000000e+00 : f32
    %16 = vector.broadcast %cst_13 : f32 to vector<8x128xf32>
    %17 = arith.maximumf %15, %16 : vector<8x128xf32>
    %18 = arith.truncf %17 : vector<8x128xf32> to vector<8x128xbf16>
    %c1 = arith.constant 1 : index
    %c0_14 = arith.constant 0 : index
    %c0_15 = arith.constant 0 : index
    %19 = vector.load %arg4[%c1, %c0_14, %c0_15] : memref<2x128x128xbf16, #tpu.memory_space<vmem>>, vector<1x128x128xbf16>
    %20 = vector.shape_cast %19 : vector<1x128x128xbf16> to vector<128x128xbf16>
    %cst_16 = arith.constant dense<0.000000e+00> : vector<8x128xf32>
    %21 = tpu.matmul %18, %20, %cst_16 {dimension_numbers = #tpu.dot_dimension_numbers<[1], [0], [0], [1], [0, 0, 1, 1], [], []>} : vector<8x128xbf16>, vector<128x128xbf16>, vector<8x128xf32> -> vector<8x128xf32>
    %c1_17 = arith.constant 1 : index
    %c0_18 = arith.constant 0 : index
    %c0_19 = arith.constant 0 : index
    %22 = vector.load %arg5[%c1_17, %c0_18, %c0_19] : memref<2x1x128xf32, #tpu.memory_space<vmem>>, vector<1x1x128xf32>
    %23 = vector.shape_cast %22 : vector<1x1x128xf32> to vector<1x128xf32>
    %24 = vector.broadcast %23 : vector<1x128xf32> to vector<8x128xf32>
    %25 = arith.addf %21, %24 : vector<8x128xf32>
    %cst_20 = arith.constant 0.000000e+00 : f32
    %26 = vector.broadcast %cst_20 : f32 to vector<8x128xf32>
    %27 = arith.maximumf %25, %26 : vector<8x128xf32>
    %28 = arith.truncf %27 : vector<8x128xf32> to vector<8x128xbf16>
    %c0_21 = arith.constant 0 : index
    %c0_22 = arith.constant 0 : index
    %29 = vector.load %arg6[%c0_21, %c0_22] : memref<128x128xbf16, #tpu.memory_space<vmem>>, vector<128x128xbf16>
    %cst_23 = arith.constant dense<0.000000e+00> : vector<8x128xf32>
    %30 = tpu.matmul %28, %29, %cst_23 {dimension_numbers = #tpu.dot_dimension_numbers<[1], [0], [0], [1], [0, 0, 1, 1], [], []>} : vector<8x128xbf16>, vector<128x128xbf16>, vector<8x128xf32> -> vector<8x128xf32>
    %c0_24 = arith.constant 0 : index
    %c0_25 = arith.constant 0 : index
    %31 = vector.load %arg7[%c0_24, %c0_25] : memref<1x128xf32, #tpu.memory_space<vmem>>, vector<1x128xf32>
    %32 = vector.broadcast %31 : vector<1x128xf32> to vector<8x128xf32>
    %33 = arith.addf %30, %32 : vector<8x128xf32>
    %34 = arith.negf %33 : vector<8x128xf32>
    %35 = math.exp %34 : vector<8x128xf32>
    %cst_26 = arith.constant 1.000000e+00 : f32
    %36 = vector.broadcast %cst_26 : f32 to vector<8x128xf32>
    %37 = arith.addf %36, %35 : vector<8x128xf32>
    %38 = arith.divf %36, %37 : vector<8x128xf32>
    %c0_27 = arith.constant 0 : index
    %c0_28 = arith.constant 0 : index
    %39 = vector.load %arg8[%c0_27, %c0_28] : memref<8x128xf32, #tpu.memory_space<vmem>>, vector<8x128xf32>
    tpu.vector_store %arg8[%c0_27, %c0_28], %38 {strides = array<i32>} : memref<8x128xf32, #tpu.memory_space<vmem>>, vector<8x128xf32>,
    return
  }
  func.func @transform_0(%arg0: i32) -> (i32, i32) {
    %c0_i32 = arith.constant 0 : i32
    %c0_i32_0 = arith.constant 0 : i32
    return %arg0, %c0_i32 : i32, i32
  }
  func.func @transform_1(%arg0: i32) -> (i32, i32) {
    %c0_i32 = arith.constant 0 : i32
    %c0_i32_0 = arith.constant 0 : i32
    %c0_i32_1 = arith.constant 0 : i32
    return %c0_i32, %c0_i32_0 : i32, i32
  }
  func.func @transform_2(%arg0: i32) -> (i32, i32) {
    %c0_i32 = arith.constant 0 : i32
    %c0_i32_0 = arith.constant 0 : i32
    %c0_i32_1 = arith.constant 0 : i32
    return %c0_i32, %c0_i32_0 : i32, i32
  }
  func.func @transform_3(%arg0: i32) -> (i32, i32, i32) {
    %c0_i32 = arith.constant 0 : i32
    %c0_i32_0 = arith.constant 0 : i32
    %c0_i32_1 = arith.constant 0 : i32
    %c0_i32_2 = arith.constant 0 : i32
    return %c0_i32, %c0_i32_0, %c0_i32_1 : i32, i32, i32
  }
  func.func @transform_4(%arg0: i32) -> (i32, i32, i32) {
    %c0_i32 = arith.constant 0 : i32
    %c0_i32_0 = arith.constant 0 : i32
    %c0_i32_1 = arith.constant 0 : i32
    %c0_i32_2 = arith.constant 0 : i32
    return %c0_i32, %c0_i32_0, %c0_i32_1 : i32, i32, i32
  }
  func.func @transform_5(%arg0: i32) -> (i32, i32) {
    %c0_i32 = arith.constant 0 : i32
    %c0_i32_0 = arith.constant 0 : i32
    %c0_i32_1 = arith.constant 0 : i32
    return %c0_i32, %c0_i32_0 : i32, i32
  }
  func.func @transform_6(%arg0: i32) -> (i32, i32) {
    %c0_i32 = arith.constant 0 : i32
    %c0_i32_0 = arith.constant 0 : i32
    %c0_i32_1 = arith.constant 0 : i32
    return %c0_i32, %c0_i32_0 : i32, i32
  }
  func.func @transform_7(%arg0: i32) -> (i32, i32) {
    %c0_i32 = arith.constant 0 : i32
    %c0_i32_0 = arith.constant 0 : i32
    return %arg0, %c0_i32 : i32, i32
  }
}

</mosaic_0001>

<llo_original>
// kernel: tpu_custom_call.1
$region0: #{tpu_custom_call.1}
  #allocation0 [shape = 'u32[]', space=smem, size = 0x4, offset = 0x4, fixed_abs, tag = 'smem constant byte address 0x4 - core index']
  #allocation1 [shape = 'u32[72,128]{1,0:T(1,128)}', space=vmem, size = 0x9000, scoped, tag = 'internal scratch']
  %s0 = inlined_call_operand.hbm [shape: bf16[8,128], index: 0, kind: input, shape index: {}]
  %s1 = inlined_call_operand.hbm [shape: bf16[128,128], index: 1, kind: input, shape index: {}]
  %s2 = inlined_call_operand.vmem [shape: f32[1,128], index: 2, kind: input, shape index: {}]
  %s3 = inlined_call_operand.hbm [shape: bf16[2,128,128], index: 3, kind: input, shape index: {}]
  %s4 = inlined_call_operand.vmem [shape: f32[2,1,128], index: 4, kind: input, shape index: {}]
  %s5 = inlined_call_operand.hbm [shape: bf16[128,128], index: 5, kind: input, shape index: {}]
  %s6 = inlined_call_operand.vmem [shape: f32[1,128], index: 6, kind: input, shape index: {}]
  %s7 = inlined_call_operand.hbm [shape: f32[8,128], index: 7, kind: output, shape index: {}]
  %s8 = sld [smem:[#allocation0]]
  $region54: #{tpu_custom_call.1} parent=0
    _
  %s10 = ssub.s32 1, %s8
  %s11 = scalar_select 0, %s10, %s8
  $region1: #{tpu_custom_call.1} parent=0
    #allocation2 [shape = 'u8[2048]{0}', space=vmem, size = 0x800, scoped, tag = 'input window, operand 0, single buffered']
    #allocation3 [shape = 's32[1]{0}', space=sflag, size = 0x4, scoped, tag = 'scoped memory for tpu_custom_call.1']
    #allocation4 [shape = 's32[1]{0}', space=sflag, size = 0x4, scoped, tag = 'scoped memory for tpu_custom_call.1']
    #allocation5 [shape = 'u8[32768]{0}', space=vmem, size = 0x8000, scoped, tag = 'input window, operand 1, single buffered']
    #allocation6 [shape = 's32[1]{0}', space=sflag, size = 0x4, scoped, tag = 'scoped memory for tpu_custom_call.1']
    #allocation7 [shape = 'u8[65536]{0}', space=vmem, size = 0x10000, scoped, tag = 'input window, operand 3, single buffered']
    #allocation8 [shape = 'u8[32768]{0}', space=vmem, size = 0x8000, scoped, tag = 'input window, operand 5, single buffered']
    #allocation9 [shape = 's32[1]{0}', space=sflag, size = 0x4, scoped, tag = 'scoped memory for tpu_custom_call.1']
    #allocation10 [shape = 'u8[4096]{0}', space=vmem, size = 0x1000, scoped, tag = 'output window, operand 0, single buffered']
    %12 = vsyncpa [#allocation3], 0
    %13 = vsyncpa [#allocation6], 0
    %14 = vsyncpa [#allocation9], 0
    %15 = vsyncpa [#allocation4], 0
    // Predicated region
    $region2: #{tpu_custom_call.1} parent=1 // pred_check
      _
    $region3: #{tpu_custom_call.1} parent=1 // pred_check_branch
      %17 = sbr.rel (0) target = $region5
    $region4: #{tpu_custom_call.1} parent=1 // pred_region
      %19 = vsyncadd [#allocation3], 0
      %s21 = sshll.u32 %s0, 4
      %s22 = int_to_ptr.hbm [resolvable:$true] %s21
      %s23 = sshll.u32 [#allocation2], 4
      %s24 = int_to_ptr.vmem [resolvable:$true] %s23
      %26 = dma.hbm_to_vmem [thread:$0]  %s22, 64, %s24, [#allocation3]
    $region5: #{tpu_custom_call.1} parent=1 // pred_fallthru
      _
    // Predicated region
    $region6: #{tpu_custom_call.1} parent=1 // pred_check
      _
    $region7: #{tpu_custom_call.1} parent=1 // pred_check_branch
      %28 = sbr.rel (0) target = $region9
    $region8: #{tpu_custom_call.1} parent=1 // pred_region
      %30 = vsyncadd [#allocation6], 0
      %s31 = sshll.u32 %s1, 4
      %s32 = int_to_ptr.hbm [resolvable:$true] %s31
      %s33 = sshll.u32 [#allocation5], 4
      %s34 = int_to_ptr.vmem [resolvable:$true] %s33
      %39 = dma.hbm_to_vmem [thread:$0]  %s32, 1024, %s34, [#allocation6], 64, 64, 4
    $region9: #{tpu_custom_call.1} parent=1 // pred_fallthru
      _
    // Predicated region
    $region10: #{tpu_custom_call.1} parent=1 // pred_check
      _
    $region11: #{tpu_custom_call.1} parent=1 // pred_check_branch
      %41 = sbr.rel (0) target = $region13
    $region12: #{tpu_custom_call.1} parent=1 // pred_region
      _
    $region13: #{tpu_custom_call.1} parent=1 // pred_fallthru
      _
    // Predicated region
    $region14: #{tpu_custom_call.1} parent=1 // pred_check
      _
    $region15: #{tpu_custom_call.1} parent=1 // pred_check_branch
      %43 = sbr.rel (0) target = $region17
    $region16: #{tpu_custom_call.1} parent=1 // pred_region
      %45 = vsyncadd [#allocation6], 0
      %s46 = sshll.u32 %s3, 4
      %s47 = int_to_ptr.hbm [resolvable:$true] %s46
      %s48 = sshll.u32 [#allocation7], 4
      %s49 = int_to_ptr.vmem [resolvable:$true] %s48
      %54 = dma.hbm_to_vmem [thread:$0]  %s47, 2048, %s49, [#allocation6], 64, 64, 4
    $region17: #{tpu_custom_call.1} parent=1 // pred_fallthru
      _
    // Predicated region
    $region18: #{tpu_custom_call.1} parent=1 // pred_check
      _
    $region19: #{tpu_custom_call.1} parent=1 // pred_check_branch
      %56 = sbr.rel (0) target = $region21
    $region20: #{tpu_custom_call.1} parent=1 // pred_region
      _
    $region21: #{tpu_custom_call.1} parent=1 // pred_fallthru
      _
    // Predicated region
    $region22: #{tpu_custom_call.1} parent=1 // pred_check
      _
    $region23: #{tpu_custom_call.1} parent=1 // pred_check_branch
      %58 = sbr.rel (0) target = $region25
    $region24: #{tpu_custom_call.1} parent=1 // pred_region
      %60 = vsyncadd [#allocation9], 0
      %s61 = sshll.u32 %s5, 4
      %s62 = int_to_ptr.hbm [resolvable:$true] %s61
      %s63 = sshll.u32 [#allocation8], 4
      %s64 = int_to_ptr.vmem [resolvable:$true] %s63
      %69 = dma.hbm_to_vmem [thread:$0]  %s62, 1024, %s64, [#allocation9], 64, 64, 4
    $region25: #{tpu_custom_call.1} parent=1 // pred_fallthru
      _
    // Predicated region
    $region26: #{tpu_custom_call.1} parent=1 // pred_check
      _
    $region27: #{tpu_custom_call.1} parent=1 // pred_check_branch
      %71 = sbr.rel (0) target = $region29
    $region28: #{tpu_custom_call.1} parent=1 // pred_region
      _
    $region29: #{tpu_custom_call.1} parent=1 // pred_fallthru
      _
    // Predicated region
    $region30: #{tpu_custom_call.1} parent=1 // pred_check
      _
    $region31: #{tpu_custom_call.1} parent=1 // pred_check_branch
      %73 = sbr.rel (0) target = $region33
    $region32: #{tpu_custom_call.1} parent=1 // pred_region
      %75 = dma.done [#allocation3], 64
    $region33: #{tpu_custom_call.1} parent=1 // pred_fallthru
      _
    // Predicated region
    $region34: #{tpu_custom_call.1} parent=1 // pred_check
      _
    $region35: #{tpu_custom_call.1} parent=1 // pred_check_branch
      %77 = sbr.rel (0) target = $region37
    $region36: #{tpu_custom_call.1} parent=1 // pred_region
      %79 = dma.done [#allocation6], 1024
    $region37: #{tpu_custom_call.1} parent=1 // pred_fallthru
      _
    // Predicated region
    $region38: #{tpu_custom_call.1} parent=1 // pred_check
      _
    $region39: #{tpu_custom_call.1} parent=1 // pred_check_branch
      %81 = sbr.rel (0) target = $region41
    $region40: #{tpu_custom_call.1} parent=1 // pred_region
      %83 = dma.done [#allocation6], 2048
    $region41: #{tpu_custom_call.1} parent=1 // pred_fallthru
      _
    // Predicated region
    $region42: #{tpu_custom_call.1} parent=1 // pred_check
      _
    $region43: #{tpu_custom_call.1} parent=1 // pred_check_branch
      %85 = sbr.rel (0) target = $region45
    $region44: #{tpu_custom_call.1} parent=1 // pred_region
      %87 = dma.done [#allocation9], 1024
    $region45: #{tpu_custom_call.1} parent=1 // pred_fallthru
      _
    %v88 = vld [vmem:[#allocation2] sm:$0xf]
    %v89 = vld [vmem:[#allocation5] sm:$0xf]
    %v90 = vld [vmem:[#allocation5 + $0x4] sm:$0xf]
    %v91 = vld [vmem:[#allocation5 + $0x8] sm:$0xf]
    %v92 = vld [vmem:[#allocation5 + $0xc] sm:$0xf]
    %v93 = vld [vmem:[#allocation5 + $0x10] sm:$0xf]
    %v94 = vld [vmem:[#allocation5 + $0x14] sm:$0xf]
    %v95 = vld [vmem:[#allocation5 + $0x18] sm:$0xf]
    %v96 = vld [vmem:[#allocation5 + $0x1c] sm:$0xf]
    %v97 = vld [vmem:[#allocation5 + $0x20] sm:$0xf]
    %v98 = vld [vmem:[#allocation5 + $0x24] sm:$0xf]
    %v99 = vld [vmem:[#allocation5 + $0x28] sm:$0xf]
    %v100 = vld [vmem:[#allocation5 + $0x2c] sm:$0xf]
    %v101 = vld [vmem:[#allocation5 + $0x30] sm:$0xf]
    %v102 = vld [vmem:[#allocation5 + $0x34] sm:$0xf]
    %v103 = vld [vmem:[#allocation5 + $0x38] sm:$0xf]
    %v104 = vld [vmem:[#allocation5 + $0x3c] sm:$0xf]
    %v105 = vld [vmem:[%s2] sm:$0x1]
    %v107 = vperm.slane %v105, 0
    %v125 = vunpack.c.l.b16 %v89
    %v126 = vunpack.c.l.b16 %v90
    %v127 = vunpack.c.l.b16 %v91
    %v128 = vunpack.c.l.b16 %v92
    %v129 = vunpack.c.l.b16 %v93
    %v130 = vunpack.c.l.b16 %v94
    %v131 = vunpack.c.l.b16 %v95
    %v132 = vunpack.c.l.b16 %v96
    %v133 = vunpack.c.l.b16 %v97
    %v134 = vunpack.c.l.b16 %v98
    %v135 = vunpack.c.l.b16 %v99
    %v136 = vunpack.c.l.b16 %v100
    %v137 = vunpack.c.l.b16 %v101
    %v138 = vunpack.c.l.b16 %v102
    %v139 = vunpack.c.l.b16 %v103
    %v140 = vunpack.c.l.b16 %v104
    %v141 = vpack.c.b16 %v126, %v125
    %v142 = vpack.c.b16 %v128, %v127
    %v143 = vpack.c.b16 %v130, %v129
    %v144 = vpack.c.b16 %v132, %v131
    %v145 = vpack.c.b16 %v134, %v133
    %v146 = vpack.c.b16 %v136, %v135
    %v147 = vpack.c.b16 %v138, %v137
    %v148 = vpack.c.b16 %v140, %v139
    %157 = vmatpush.bf16.msra.mxu0 %v148
    %158 = vmatpush.bf16.msra.mxu0 %v147
    %159 = vmatpush.bf16.msra.mxu0 %v146
    %160 = vmatpush.bf16.msra.mxu0 %v145
    %161 = vmatpush.bf16.msra.mxu0 %v144
    %162 = vmatpush.bf16.msra.mxu0 %v143
    %163 = vmatpush.bf16.msra.mxu0 %v142
    %164 = vmatpush.bf16.msra.mxu0 %v141
    %165 = vmatmul.bf16.gmra.mxu0 %v88
    %v166 = vpop.f32.mrf.mxu0
    %v167 = vadd.f32 %v107, %v166
    %v168 = vpop.f32.mrf.mxu0
    %169 = vdwg.mxu0
    %v170 = vmax.f32 %v167, 0.0
    %v171 = vpack.c.bf16 %v170, %v170
    %v172 = vld [vmem:[#allocation7] sm:$0xf]
    %v173 = vld [vmem:[#allocation7 + $0x4] sm:$0xf]
    %v174 = vld [vmem:[#allocation7 + $0x8] sm:$0xf]
    %v175 = vld [vmem:[#allocation7 + $0xc] sm:$0xf]
    %v176 = vld [vmem:[#allocation7 + $0x10] sm:$0xf]
    %v177 = vld [vmem:[#allocation7 + $0x14] sm:$0xf]
    %v178 = vld [vmem:[#allocation7 + $0x18] sm:$0xf]
    %v179 = vld [vmem:[#allocation7 + $0x1c] sm:$0xf]
    %v180 = vld [vmem:[#allocation7 + $0x20] sm:$0xf]
    %v181 = vld [vmem:[#allocation7 + $0x24] sm:$0xf]
    %v182 = vld [vmem:[#allocation7 + $0x28] sm:$0xf]
    %v183 = vld [vmem:[#allocation7 + $0x2c] sm:$0xf]
    %v184 = vld [vmem:[#allocation7 + $0x30] sm:$0xf]
    %v185 = vld [vmem:[#allocation7 + $0x34] sm:$0xf]
    %v186 = vld [vmem:[#allocation7 + $0x38] sm:$0xf]
    %v187 = vld [vmem:[#allocation7 + $0x3c] sm:$0xf]
    %v188 = vld [vmem:[%s4] sm:$0x1]
    %v190 = vperm.slane %v188, 0
    %v208 = vunpack.c.l.b16 %v172
    %v209 = vunpack.c.l.b16 %v173
    %v210 = vunpack.c.l.b16 %v174
    %v211 = vunpack.c.l.b16 %v175
    %v212 = vunpack.c.l.b16 %v176
    %v213 = vunpack.c.l.b16 %v177
    %v214 = vunpack.c.l.b16 %v178
    %v215 = vunpack.c.l.b16 %v179
    %v216 = vunpack.c.l.b16 %v180
    %v217 = vunpack.c.l.b16 %v181
    %v218 = vunpack.c.l.b16 %v182
    %v219 = vunpack.c.l.b16 %v183
    %v220 = vunpack.c.l.b16 %v184
    %v221 = vunpack.c.l.b16 %v185
    %v222 = vunpack.c.l.b16 %v186
    %v223 = vunpack.c.l.b16 %v187
    %v224 = vpack.c.b16 %v209, %v208
    %v225 = vpack.c.b16 %v211, %v210
    %v226 = vpack.c.b16 %v213, %v212
    %v227 = vpack.c.b16 %v215, %v214
    %v228 = vpack.c.b16 %v217, %v216
    %v229 = vpack.c.b16 %v219, %v218
    %v230 = vpack.c.b16 %v221, %v220
    %v231 = vpack.c.b16 %v223, %v222
    %240 = vmatpush.bf16.msra.mxu0 %v231
    %241 = vmatpush.bf16.msra.mxu0 %v230
    %242 = vmatpush.bf16.msra.mxu0 %v229
    %243 = vmatpush.bf16.msra.mxu0 %v228
    %244 = vmatpush.bf16.msra.mxu0 %v227
    %245 = vmatpush.bf16.msra.mxu0 %v226
    %246 = vmatpush.bf16.msra.mxu0 %v225
    %247 = vmatpush.bf16.msra.mxu0 %v224
    %248 = vmatmul.bf16.gmra.mxu0 %v171
    %v249 = vpop.f32.mrf.mxu0
    %v250 = vadd.f32 %v190, %v249
    %v251 = vpop.f32.mrf.mxu0
    %252 = vdwg.mxu0
    %v253 = vmax.f32 %v250, 0.0
    %v254 = vpack.c.bf16 %v253, %v253
    %s255 = scalar_lea.vmem [#allocation7], 64
    %v256 = vld [vmem:[%s255] sm:$0xf]
    %v257 = vld [vmem:[%s255 + $0x4] sm:$0xf]
    %v258 = vld [vmem:[%s255 + $0x8] sm:$0xf]
    %v259 = vld [vmem:[%s255 + $0xc] sm:$0xf]
    %v260 = vld [vmem:[%s255 + $0x10] sm:$0xf]
    %v261 = vld [vmem:[%s255 + $0x14] sm:$0xf]
    %v262 = vld [vmem:[%s255 + $0x18] sm:$0xf]
    %v263 = vld [vmem:[%s255 + $0x1c] sm:$0xf]
    %v264 = vld [vmem:[%s255 + $0x20] sm:$0xf]
    %v265 = vld [vmem:[%s255 + $0x24] sm:$0xf]
    %v266 = vld [vmem:[%s255 + $0x28] sm:$0xf]
    %v267 = vld [vmem:[%s255 + $0x2c] sm:$0xf]
    %v268 = vld [vmem:[%s255 + $0x30] sm:$0xf]
    %v269 = vld [vmem:[%s255 + $0x34] sm:$0xf]
    %v270 = vld [vmem:[%s255 + $0x38] sm:$0xf]
    %v271 = vld [vmem:[%s255 + $0x3c] sm:$0xf]
    %s272 = scalar_lea.vmem %s4, 1
    %v273 = vld [vmem:[%s272] sm:$0x1]
    %v275 = vperm.slane %v273, 0
    %v293 = vunpack.c.l.b16 %v256
    %v294 = vunpack.c.l.b16 %v257
    %v295 = vunpack.c.l.b16 %v258
    %v296 = vunpack.c.l.b16 %v259
    %v297 = vunpack.c.l.b16 %v260
    %v298 = vunpack.c.l.b16 %v261
    %v299 = vunpack.c.l.b16 %v262
    %v300 = vunpack.c.l.b16 %v263
    %v301 = vunpack.c.l.b16 %v264
    %v302 = vunpack.c.l.b16 %v265
    %v303 = vunpack.c.l.b16 %v266
    %v304 = vunpack.c.l.b16 %v267
    %v305 = vunpack.c.l.b16 %v268
    %v306 = vunpack.c.l.b16 %v269
    %v307 = vunpack.c.l.b16 %v270
    %v308 = vunpack.c.l.b16 %v271
    %v309 = vpack.c.b16 %v294, %v293
    %v310 = vpack.c.b16 %v296, %v295
    %v311 = vpack.c.b16 %v298, %v297
    %v312 = vpack.c.b16 %v300, %v299
    %v313 = vpack.c.b16 %v302, %v301
    %v314 = vpack.c.b16 %v304, %v303
    %v315 = vpack.c.b16 %v306, %v305
    %v316 = vpack.c.b16 %v308, %v307
    %325 = vmatpush.bf16.msra.mxu0 %v316
    %326 = vmatpush.bf16.msra.mxu0 %v315
    %327 = vmatpush.bf16.msra.mxu0 %v314
    %328 = vmatpush.bf16.msra.mxu0 %v313
    %329 = vmatpush.bf16.msra.mxu0 %v312
    %330 = vmatpush.bf16.msra.mxu0 %v311
    %331 = vmatpush.bf16.msra.mxu0 %v310
    %332 = vmatpush.bf16.msra.mxu0 %v309
    %333 = vmatmul.bf16.gmra.mxu0 %v254
    %v334 = vpop.f32.mrf.mxu0
    %v335 = vadd.f32 %v275, %v334
    %v336 = vpop.f32.mrf.mxu0
    %337 = vdwg.mxu0
    %v338 = vmax.f32 %v335, 0.0
    %v339 = vpack.c.bf16 %v338, %v338
    %v340 = vld [vmem:[#allocation8] sm:$0xf]
    %v341 = vld [vmem:[#allocation8 + $0x4] sm:$0xf]
    %v342 = vld [vmem:[#allocation8 + $0x8] sm:$0xf]
    %v343 = vld [vmem:[#allocation8 + $0xc] sm:$0xf]
    %v344 = vld [vmem:[#allocation8 + $0x10] sm:$0xf]
    %v345 = vld [vmem:[#allocation8 + $0x14] sm:$0xf]
    %v346 = vld [vmem:[#allocation8 + $0x18] sm:$0xf]
    %v347 = vld [vmem:[#allocation8 + $0x1c] sm:$0xf]
    %v348 = vld [vmem:[#allocation8 + $0x20] sm:$0xf]
    %v349 = vld [vmem:[#allocation8 + $0x24] sm:$0xf]
    %v350 = vld [vmem:[#allocation8 + $0x28] sm:$0xf]
    %v351 = vld [vmem:[#allocation8 + $0x2c] sm:$0xf]
    %v352 = vld [vmem:[#allocation8 + $0x30] sm:$0xf]
    %v353 = vld [vmem:[#allocation8 + $0x34] sm:$0xf]
    %v354 = vld [vmem:[#allocation8 + $0x38] sm:$0xf]
    %v355 = vld [vmem:[#allocation8 + $0x3c] sm:$0xf]
    %v356 = vld [vmem:[%s6] sm:$0x1]
    %v358 = vperm.slane %v356, 0
    %v376 = vunpack.c.l.b16 %v340
    %v377 = vunpack.c.l.b16 %v341
    %v378 = vunpack.c.l.b16 %v342
    %v379 = vunpack.c.l.b16 %v343
    %v380 = vunpack.c.l.b16 %v344
    %v381 = vunpack.c.l.b16 %v345
    %v382 = vunpack.c.l.b16 %v346
    %v383 = vunpack.c.l.b16 %v347
    %v384 = vunpack.c.l.b16 %v348
    %v385 = vunpack.c.l.b16 %v349
    %v386 = vunpack.c.l.b16 %v350
    %v387 = vunpack.c.l.b16 %v351
    %v388 = vunpack.c.l.b16 %v352
    %v389 = vunpack.c.l.b16 %v353
    %v390 = vunpack.c.l.b16 %v354
    %v391 = vunpack.c.l.b16 %v355
    %v392 = vpack.c.b16 %v377, %v376
    %v393 = vpack.c.b16 %v379, %v378
    %v394 = vpack.c.b16 %v381, %v380
    %v395 = vpack.c.b16 %v383, %v382
    %v396 = vpack.c.b16 %v385, %v384
    %v397 = vpack.c.b16 %v387, %v386
    %v398 = vpack.c.b16 %v389, %v388
    %v399 = vpack.c.b16 %v391, %v390
    %408 = vmatpush.bf16.msra.mxu0 %v399
    %409 = vmatpush.bf16.msra.mxu0 %v398
    %410 = vmatpush.bf16.msra.mxu0 %v397
    %411 = vmatpush.bf16.msra.mxu0 %v396
    %412 = vmatpush.bf16.msra.mxu0 %v395
    %413 = vmatpush.bf16.msra.mxu0 %v394
    %414 = vmatpush.bf16.msra.mxu0 %v393
    %415 = vmatpush.bf16.msra.mxu0 %v392
    %416 = vmatmul.bf16.gmra.mxu0 %v339
    %v417 = vpop.f32.mrf.mxu0
    %v418 = vadd.f32 %v358, %v417
    %v419 = vpop.f32.mrf.mxu0
    %420 = vdwg.mxu0
    %v421 = vxor.u32 %v418, 2147483648
    %v422 = vmul.f32 %v421, 1.442695
    %v423 = vpow.pop %v422
    %v424 = vadd.f32 %v423, 1.0
    %v425 = vrcp.pop %v424
    %v426 = vmul.f32 %v424, %v425
    %v427 = vsub.f32 1.0, %v426
    %v428 = vmul.f32 %v425, %v427
    %v429 = vadd.f32 %v425, %v428
    %vm430 = vweird.f32 %v424
    %vm431 = vweird.f32 %v425
    %vm432 = vmor %vm430, %vm431
    %v433 = vsel %vm432, %v425, %v429
    %v434 = vand.u32 2147483647, %v424
    %vm435 = vcmp.eq.f32.partialorder %v434, 8.507059e+37
    %v436 = vand.u32 %v424, 2147483648
    %v437 = vor.u32 1.1754944e-38, %v436
    %v438 = vsel %vm435, %v437, %v433
    %v439 = vmul.f32 1.0, %v438
    %440 = vst [vmem:[#allocation10] sm:$0xff] %v439
    // Predicated region
    $region46: #{tpu_custom_call.1} parent=1 // pred_check
      _
    $region47: #{tpu_custom_call.1} parent=1 // pred_check_branch
      %442 = sbr.rel (0) target = $region49
    $region48: #{tpu_custom_call.1} parent=1 // pred_region
      %444 = vsyncadd [#allocation4], 0
      %s446 = sshll.u32 [#allocation10], 4
      %s447 = int_to_ptr.vmem [resolvable:$true] %s446
      %s448 = sshll.u32 %s7, 4
      %s449 = int_to_ptr.hbm [resolvable:$true] %s448
      %451 = dma.vmem_to_hbm [thread:$0]  %s447, 128, %s449, [#allocation4]
    $region49: #{tpu_custom_call.1} parent=1 // pred_fallthru
      _
    // Predicated region
    $region50: #{tpu_custom_call.1} parent=1 // pred_check
      _
    $region51: #{tpu_custom_call.1} parent=1 // pred_check_branch
      %453 = sbr.rel (0) target = $region53
    $region52: #{tpu_custom_call.1} parent=1 // pred_region
      %455 = dma.done [#allocation4], 128
    $region53: #{tpu_custom_call.1} parent=1 // pred_fallthru
      _
    %456 = vsyncpa [#allocation3], 1
    %457 = vsyncpa [#allocation6], 1
    %458 = vsyncpa [#allocation9], 1
    %459 = vsyncpa [#allocation4], 1

</llo_original>
